<compile_context>
chip_gen: v7x
topology: tpu7x:2x2x1
jax: 0.10.0
libtpu: 0.0.40
codegen_flags: <defaults>
</compile_context>

<pallas_src>
import functools

import jax
import jax.numpy as jnp
from jax.experimental import pallas as pl
from jax.experimental.pallas import tpu as pltpu

LANE = 128     # lane-dim padding granularity
SUBLANE = 8    # sublane-dim padding granularity


def _round_up(x, m):
    return ((x + m - 1) // m) * m


def mlp_kernel(x_ref, w1_ref, b1_ref, w2_ref, b2_ref, o_ref):
    # fl1: x @ W1^T  (bf16 operands, f32 accumulate), bias + ReLU in f32.
    h = jnp.dot(x_ref[...], w1_ref[...], preferred_element_type=jnp.float32)
    h = jnp.maximum(h + b1_ref[...], 0.0)
    # fl2: cast hidden back to the weight dtype (bf16) for the MXU, f32 acc.
    o = jnp.dot(h.astype(w2_ref.dtype), w2_ref[...],
                preferred_element_type=jnp.float32)
    o_ref[...] = (o + b2_ref[...]).astype(o_ref.dtype)


def prepare_params(w1, b1, w2, b2, *, weight_dtype=jnp.bfloat16):
    """One-time parameter prep: transpose to (in, out), zero-pad to LANE
    multiples, cast weights to bf16.  Biases stay f32."""
    h1, k = w1.shape
    o = w2.shape[0]
    k_pad = _round_up(k, LANE)
    h_pad = _round_up(h1, LANE)
    o_pad = _round_up(o, LANE)

    w1_t = jnp.zeros((k_pad, h_pad), weight_dtype).at[:k, :h1].set(
        w1.T.astype(weight_dtype))
    b1_p = jnp.zeros((1, h_pad), jnp.float32).at[0, :h1].set(
        b1.astype(jnp.float32))
    w2_t = jnp.zeros((h_pad, o_pad), weight_dtype).at[:h1, :o].set(
        w2.T.astype(weight_dtype))
    b2_p = jnp.zeros((1, o_pad), jnp.float32).at[0, :o].set(
        b2.astype(jnp.float32))
    return (w1_t, b1_p, w2_t, b2_p), (k, h1, o)


@functools.partial(jax.jit, static_argnames=("dims", "max_batch_tile"))
def linear_net_forward(x, params, dims, *, max_batch_tile=256):
    """Forward pass of Linear_Net on padded, lane-dense tiles.

    x      : (B, input_size) float32
    params : output of prepare_params (padded bf16 weights + f32 biases)
    dims   : (input_size, hidden_size1, output_size) true (unpadded) sizes
    """
    w1_t, b1_p, w2_t, b2_p = params
    k, h1, o = dims
    b = x.shape[0]
    k_pad, h_pad = w1_t.shape
    o_pad = w2_t.shape[1]

    # Batch tile: multiple of 8 sublanes, capped; batch padded to a tile multiple.
    tb = min(max_batch_tile, _round_up(b, SUBLANE))
    b_pad = _round_up(b, tb)
    grid = (b_pad // tb,)

    act_dtype = w1_t.dtype
    act_bytes = jnp.dtype(act_dtype).itemsize

    # Pad the activations to the lane-dense, batch-tiled slab the kernel expects.
    x_p = jnp.pad(x.astype(act_dtype), ((0, b_pad - b), (0, k_pad - k)))

    # VMEM budget (double-buffered activation/output tiles + resident weights)
    # plus headroom; clamped well under v7x's 64 MiB physical VMEM.
    vmem_needed = (2 * tb * k_pad * act_bytes                     # x tiles
                   + 2 * tb * o_pad * 4                           # out tiles (f32)
                   + (k_pad * h_pad + h_pad * o_pad) * act_bytes  # resident weights
                   + (h_pad + o_pad) * 4                          # biases
                   + tb * h_pad * 4)                              # f32 hidden
    vmem_limit = min(int(1.5 * vmem_needed) + (1 << 20), 48 << 20)

    flops = 2 * b_pad * (k_pad * h_pad + h_pad * o_pad)
    bytes_accessed = (x_p.size * act_bytes
                      + (w1_t.size + w2_t.size) * act_bytes
                      + (b1_p.size + b2_p.size) * 4
                      + b_pad * o_pad * 4)

    vmem = pltpu.MemorySpace.VMEM
    out = pl.pallas_call(
        mlp_kernel,
        out_shape=jax.ShapeDtypeStruct((b_pad, o_pad), jnp.float32),
        grid=grid,
        in_specs=[
            pl.BlockSpec((tb, k_pad), lambda i: (i, 0), memory_space=vmem),
            pl.BlockSpec((k_pad, h_pad), lambda i: (0, 0), memory_space=vmem),
            pl.BlockSpec((1, h_pad), lambda i: (0, 0), memory_space=vmem),
            pl.BlockSpec((h_pad, o_pad), lambda i: (0, 0), memory_space=vmem),
            pl.BlockSpec((1, o_pad), lambda i: (0, 0), memory_space=vmem),
        ],
        out_specs=pl.BlockSpec((tb, o_pad), lambda i: (i, 0), memory_space=vmem),
        compiler_params=pltpu.CompilerParams(
            dimension_semantics=("parallel",),
            vmem_limit_bytes=vmem_limit,
        ),
        cost_estimate=pl.CostEstimate(
            flops=flops, transcendentals=0, bytes_accessed=bytes_accessed),
    )(x_p, w1_t, b1_p, w2_t, b2_p)

    # Slice away batch / output-lane padding (padded columns are exactly zero).
    return out[:b, :o]


def init_linear_params(key, out_features, in_features):
    """Deterministic init mimicking nn.Linear's uniform(-1/sqrt(in), 1/sqrt(in))."""
    k_w, k_b = jax.random.split(key)
    bound = 1.0 / jnp.sqrt(jnp.float32(in_features))
    w = jax.random.uniform(k_w, (out_features, in_features), jnp.float32,
                           minval=-bound, maxval=bound)
    b = jax.random.uniform(k_b, (out_features,), jnp.float32,
                           minval=-bound, maxval=bound)
    return w, b


if __name__ == "__main__":
    # Small shapes consistent with Linear_Net(input_size, hidden_size1, output_size).
    batch = 8
    input_size = 32
    hidden_size1 = 64
    output_size = 2

    key = jax.random.PRNGKey(0)
    k_x, k_l1, k_l2 = jax.random.split(key, 3)

    x = jax.random.normal(k_x, (batch, input_size), jnp.float32)
    w1, b1 = init_linear_params(k_l1, hidden_size1, input_size)
    w2, b2 = init_linear_params(k_l2, output_size, hidden_size1)

    # One-time parameter preparation (transpose + pad + bf16 cast); the hot path
    # only does the padded-batch copy and the pallas_call.
    params, dims = prepare_params(w1, b1, w2, b2)

    out = linear_net_forward(x, params, dims)
    out = jax.block_until_ready(out)

    # Reference in plain JAX (same semantics as the PyTorch forward), f32.
    ref = jnp.maximum(x @ w1.T + b1, 0.0) @ w2.T + b2

    assert out.shape == (batch, output_size)
    # bf16 operands with f32 accumulation -> loosened tolerance vs pure-f32 ref.
    assert jnp.allclose(out, ref, atol=2e-2, rtol=2e-2), (
        f"max abs err {jnp.max(jnp.abs(out - ref))}")

    print("KERNEL_OK")
</pallas_src>

<mosaic_0001>
module attributes {stable_mosaic.version = 11 : i64} {
  func.func @mlp_kernel(%arg0: i32, %arg1: memref<8x128xbf16, #tpu.memory_space<vmem>>, %arg2: memref<128x128xbf16, #tpu.memory_space<vmem>>, %arg3: memref<1x128xf32, #tpu.memory_space<vmem>>, %arg4: memref<128x128xbf16, #tpu.memory_space<vmem>>, %arg5: memref<1x128xf32, #tpu.memory_space<vmem>>, %arg6: memref<8x128xf32, #tpu.memory_space<vmem>>) attributes {dimension_semantics = [#tpu.dimension_semantics<parallel>], iteration_bounds = array<i64: 1>, scalar_prefetch = 0 : i64, scratch_operands = 0 : i64, tpu.core_type = #tpu.core_type<tc>, window_params = [{transform_indices = @transform_0, window_bounds = array<i64: 8, 128>}, {pipeline_mode = #tpu.pipeline_mode<synchronous>, transform_indices = @transform_1, window_bounds = array<i64: 128, 128>}, {pipeline_mode = #tpu.pipeline_mode<synchronous>, transform_indices = @transform_2, window_bounds = array<i64: 1, 128>}, {pipeline_mode = #tpu.pipeline_mode<synchronous>, transform_indices = @transform_3, window_bounds = array<i64: 128, 128>}, {pipeline_mode = #tpu.pipeline_mode<synchronous>, transform_indices = @transform_4, window_bounds = array<i64: 1, 128>}, {transform_indices = @transform_5, window_bounds = array<i64: 8, 128>}]} {
    %c0 = arith.constant 0 : index
    %c0_0 = arith.constant 0 : index
    %0 = vector.load %arg1[%c0, %c0_0] : memref<8x128xbf16, #tpu.memory_space<vmem>>, vector<8x128xbf16>
    %c0_1 = arith.constant 0 : index
    %c0_2 = arith.constant 0 : index
    %1 = vector.load %arg2[%c0_1, %c0_2] : memref<128x128xbf16, #tpu.memory_space<vmem>>, vector<128x128xbf16>
    %cst = arith.constant dense<0.000000e+00> : vector<8x128xf32>
    %2 = tpu.matmul %0, %1, %cst {dimension_numbers = #tpu.dot_dimension_numbers<[1], [0], [0], [1], [0, 0, 1, 1], [], []>} : vector<8x128xbf16>, vector<128x128xbf16>, vector<8x128xf32> -> vector<8x128xf32>
    %c0_3 = arith.constant 0 : index
    %c0_4 = arith.constant 0 : index
    %3 = vector.load %arg3[%c0_3, %c0_4] : memref<1x128xf32, #tpu.memory_space<vmem>>, vector<1x128xf32>
    %4 = vector.broadcast %3 : vector<1x128xf32> to vector<8x128xf32>
    %5 = arith.addf %2, %4 : vector<8x128xf32>
    %cst_5 = arith.constant 0.000000e+00 : f32
    %6 = vector.broadcast %cst_5 : f32 to vector<8x128xf32>
    %7 = arith.maximumf %5, %6 : vector<8x128xf32>
    %8 = arith.truncf %7 : vector<8x128xf32> to vector<8x128xbf16>
    %c0_6 = arith.constant 0 : index
    %c0_7 = arith.constant 0 : index
    %9 = vector.load %arg4[%c0_6, %c0_7] : memref<128x128xbf16, #tpu.memory_space<vmem>>, vector<128x128xbf16>
    %cst_8 = arith.constant dense<0.000000e+00> : vector<8x128xf32>
    %10 = tpu.matmul %8, %9, %cst_8 {dimension_numbers = #tpu.dot_dimension_numbers<[1], [0], [0], [1], [0, 0, 1, 1], [], []>} : vector<8x128xbf16>, vector<128x128xbf16>, vector<8x128xf32> -> vector<8x128xf32>
    %c0_9 = arith.constant 0 : index
    %c0_10 = arith.constant 0 : index
    %11 = vector.load %arg5[%c0_9, %c0_10] : memref<1x128xf32, #tpu.memory_space<vmem>>, vector<1x128xf32>
    %12 = vector.broadcast %11 : vector<1x128xf32> to vector<8x128xf32>
    %13 = arith.addf %10, %12 : vector<8x128xf32>
    %c0_11 = arith.constant 0 : index
    %c0_12 = arith.constant 0 : index
    %14 = vector.load %arg6[%c0_11, %c0_12] : memref<8x128xf32, #tpu.memory_space<vmem>>, vector<8x128xf32>
    tpu.vector_store %arg6[%c0_11, %c0_12], %13 {strides = array<i32>} : memref<8x128xf32, #tpu.memory_space<vmem>>, vector<8x128xf32>,
    return
  }
  func.func @transform_0(%arg0: i32) -> (i32, i32) {
    %c0_i32 = arith.constant 0 : i32
    %c0_i32_0 = arith.constant 0 : i32
    return %arg0, %c0_i32 : i32, i32
  }
  func.func @transform_1(%arg0: i32) -> (i32, i32) {
    %c0_i32 = arith.constant 0 : i32
    %c0_i32_0 = arith.constant 0 : i32
    %c0_i32_1 = arith.constant 0 : i32
    return %c0_i32, %c0_i32_0 : i32, i32
  }
  func.func @transform_2(%arg0: i32) -> (i32, i32) {
    %c0_i32 = arith.constant 0 : i32
    %c0_i32_0 = arith.constant 0 : i32
    %c0_i32_1 = arith.constant 0 : i32
    return %c0_i32, %c0_i32_0 : i32, i32
  }
  func.func @transform_3(%arg0: i32) -> (i32, i32) {
    %c0_i32 = arith.constant 0 : i32
    %c0_i32_0 = arith.constant 0 : i32
    %c0_i32_1 = arith.constant 0 : i32
    return %c0_i32, %c0_i32_0 : i32, i32
  }
  func.func @transform_4(%arg0: i32) -> (i32, i32) {
    %c0_i32 = arith.constant 0 : i32
    %c0_i32_0 = arith.constant 0 : i32
    %c0_i32_1 = arith.constant 0 : i32
    return %c0_i32, %c0_i32_0 : i32, i32
  }
  func.func @transform_5(%arg0: i32) -> (i32, i32) {
    %c0_i32 = arith.constant 0 : i32
    %c0_i32_0 = arith.constant 0 : i32
    return %arg0, %c0_i32 : i32, i32
  }
}

</mosaic_0001>

<llo_original>
// kernel: linear_net_forward.1
$region0: #{linear_net_forward.1}
  #allocation0 [shape = 'u32[]', space=smem, size = 0x4, offset = 0x4, fixed_abs, tag = 'smem constant byte address 0x4 - core index']
  #allocation1 [shape = 'u32[144,128]{1,0:T(1,128)}', space=vmem, size = 0x12000, scoped, tag = 'internal scratch']
  %s0 = inlined_call_operand.vmem [shape: bf16[8,128], index: 0, kind: input, shape index: {}]
  %s1 = inlined_call_operand.hbm [shape: bf16[128,128], index: 1, kind: input, shape index: {}]
  %s2 = inlined_call_operand.vmem [shape: f32[1,128], index: 2, kind: input, shape index: {}]
  %s3 = inlined_call_operand.hbm [shape: bf16[128,128], index: 3, kind: input, shape index: {}]
  %s4 = inlined_call_operand.vmem [shape: f32[1,128], index: 4, kind: input, shape index: {}]
  %s5 = inlined_call_operand.vmem [shape: f32[8,128], index: 5, kind: output, shape index: {}]
  %s6 = sld [smem:[#allocation0]]
  $region38: #{linear_net_forward.1} parent=0
    _
  %s8 = ssub.s32 1, %s6
  %s9 = scalar_select 0, %s8, %s6
  $region1: #{linear_net_forward.1} parent=0
    #allocation2 [shape = 'u8[32768]{0}', space=vmem, size = 0x8000, scoped, tag = 'input window, operand 1, single buffered']
    #allocation3 [shape = 's32[1]{0}', space=sflag, size = 0x4, scoped, tag = 'scoped memory for linear_net_forward.1']
    #allocation4 [shape = 'u8[32768]{0}', space=vmem, size = 0x8000, scoped, tag = 'input window, operand 3, single buffered']
    #allocation5 [shape = 's32[1]{0}', space=sflag, size = 0x4, scoped, tag = 'scoped memory for linear_net_forward.1']
    %10 = vsyncpa [#allocation3], 0
    %11 = vsyncpa [#allocation5], 0
    // Predicated region
    $region2: #{linear_net_forward.1} parent=1 // pred_check
      _
    $region3: #{linear_net_forward.1} parent=1 // pred_check_branch
      %13 = sbr.rel (0) target = $region5
    $region4: #{linear_net_forward.1} parent=1 // pred_region
      _
    $region5: #{linear_net_forward.1} parent=1 // pred_fallthru
      _
    // Predicated region
    $region6: #{linear_net_forward.1} parent=1 // pred_check
      _
    $region7: #{linear_net_forward.1} parent=1 // pred_check_branch
      %15 = sbr.rel (0) target = $region9
    $region8: #{linear_net_forward.1} parent=1 // pred_region
      %s17 = ssub.s32 1024, 1024
      %18 = vsyncadd [#allocation3], %s17
      %s19 = sshll.u32 [#allocation2], 4
      %s20 = int_to_ptr.vmem [resolvable:$true] %s19
      %25 = dma.hbm_to_vmem [thread:$0]  %s1, 1024, %s20, [#allocation3], 64, 64, 4
    $region9: #{linear_net_forward.1} parent=1 // pred_fallthru
      _
    // Predicated region
    $region10: #{linear_net_forward.1} parent=1 // pred_check
      _
    $region11: #{linear_net_forward.1} parent=1 // pred_check_branch
      %27 = sbr.rel (0) target = $region13
    $region12: #{linear_net_forward.1} parent=1 // pred_region
      _
    $region13: #{linear_net_forward.1} parent=1 // pred_fallthru
      _
    // Predicated region
    $region14: #{linear_net_forward.1} parent=1 // pred_check
      _
    $region15: #{linear_net_forward.1} parent=1 // pred_check_branch
      %29 = sbr.rel (0) target = $region17
    $region16: #{linear_net_forward.1} parent=1 // pred_region
      %s31 = ssub.s32 1024, 1024
      %32 = vsyncadd [#allocation5], %s31
      %s33 = sshll.u32 [#allocation4], 4
      %s34 = int_to_ptr.vmem [resolvable:$true] %s33
      %39 = dma.hbm_to_vmem [thread:$0]  %s3, 1024, %s34, [#allocation5], 64, 64, 4
    $region17: #{linear_net_forward.1} parent=1 // pred_fallthru
      _
    // Predicated region
    $region18: #{linear_net_forward.1} parent=1 // pred_check
      _
    $region19: #{linear_net_forward.1} parent=1 // pred_check_branch
      %41 = sbr.rel (0) target = $region21
    $region20: #{linear_net_forward.1} parent=1 // pred_region
      _
    $region21: #{linear_net_forward.1} parent=1 // pred_fallthru
      _
    // Predicated region
    $region22: #{linear_net_forward.1} parent=1 // pred_check
      _
    $region23: #{linear_net_forward.1} parent=1 // pred_check_branch
      %43 = sbr.rel (0) target = $region25
    $region24: #{linear_net_forward.1} parent=1 // pred_region
      %44 = dma.done [#allocation3], 1024
    $region25: #{linear_net_forward.1} parent=1 // pred_fallthru
      _
    // Predicated region
    $region26: #{linear_net_forward.1} parent=1 // pred_check
      _
    $region27: #{linear_net_forward.1} parent=1 // pred_check_branch
      %46 = sbr.rel (0) target = $region29
    $region28: #{linear_net_forward.1} parent=1 // pred_region
      %47 = dma.done [#allocation5], 1024
    $region29: #{linear_net_forward.1} parent=1 // pred_fallthru
      _
    %v49 = vld [vmem:[%s0] sm:$0xf]
    %v50 = vld [vmem:[#allocation2] sm:$0xf]
    %v51 = vld [vmem:[#allocation2 + $0x4] sm:$0xf]
    %v52 = vld [vmem:[#allocation2 + $0x8] sm:$0xf]
    %v53 = vld [vmem:[#allocation2 + $0xc] sm:$0xf]
    %v54 = vld [vmem:[#allocation2 + $0x10] sm:$0xf]
    %v55 = vld [vmem:[#allocation2 + $0x14] sm:$0xf]
    %v56 = vld [vmem:[#allocation2 + $0x18] sm:$0xf]
    %v57 = vld [vmem:[#allocation2 + $0x1c] sm:$0xf]
    %v58 = vld [vmem:[#allocation2 + $0x20] sm:$0xf]
    %v59 = vld [vmem:[#allocation2 + $0x24] sm:$0xf]
    %v60 = vld [vmem:[#allocation2 + $0x28] sm:$0xf]
    %v61 = vld [vmem:[#allocation2 + $0x2c] sm:$0xf]
    %v62 = vld [vmem:[#allocation2 + $0x30] sm:$0xf]
    %v63 = vld [vmem:[#allocation2 + $0x34] sm:$0xf]
    %v64 = vld [vmem:[#allocation2 + $0x38] sm:$0xf]
    %v65 = vld [vmem:[#allocation2 + $0x3c] sm:$0xf]
    %v66 = vld [vmem:[%s2] sm:$0x1]
    %v68 = vlaneseq
    %v69 = vshrl.u32 %v68, 7
    %v70 = vsub.s32 0, %v69
    %v71 = vrot.slane %v66, %v70
    %v89 = vunpack.c.l.b16 %v50
    %v90 = vunpack.c.l.b16 %v51
    %v91 = vunpack.c.l.b16 %v52
    %v92 = vunpack.c.l.b16 %v53
    %v93 = vunpack.c.l.b16 %v54
    %v94 = vunpack.c.l.b16 %v55
    %v95 = vunpack.c.l.b16 %v56
    %v96 = vunpack.c.l.b16 %v57
    %v97 = vunpack.c.l.b16 %v58
    %v98 = vunpack.c.l.b16 %v59
    %v99 = vunpack.c.l.b16 %v60
    %v100 = vunpack.c.l.b16 %v61
    %v101 = vunpack.c.l.b16 %v62
    %v102 = vunpack.c.l.b16 %v63
    %v103 = vunpack.c.l.b16 %v64
    %v104 = vunpack.c.l.b16 %v65
    %v105 = vpack.c.b16 %v90, %v89
    %v106 = vpack.c.b16 %v92, %v91
    %v107 = vpack.c.b16 %v94, %v93
    %v108 = vpack.c.b16 %v96, %v95
    %v109 = vpack.c.b16 %v98, %v97
    %v110 = vpack.c.b16 %v100, %v99
    %v111 = vpack.c.b16 %v102, %v101
    %v112 = vpack.c.b16 %v104, %v103
    %121 = vmatprep.subr.bf16.mxu0 0
    %122 = vmatpush1.bf16.msra.mxu0 %v105
    %123 = vmatprep.subr.bf16.mxu0 0
    %124 = vmatpush1.bf16.msra.mxu0 %v106
    %125 = vmatprep.subr.bf16.mxu0 0
    %126 = vmatpush1.bf16.msra.mxu0 %v107
    %127 = vmatprep.subr.bf16.mxu0 0
    %128 = vmatpush1.bf16.msra.mxu0 %v108
    %129 = vmatprep.subr.bf16.mxu0 0
    %130 = vmatpush1.bf16.msra.mxu0 %v109
    %131 = vmatprep.subr.bf16.mxu0 0
    %132 = vmatpush1.bf16.msra.mxu0 %v110
    %133 = vmatprep.subr.bf16.mxu0 0
    %134 = vmatpush1.bf16.msra.mxu0 %v111
    %135 = vmatprep.subr.bf16.mxu0 0
    %136 = vmatpush1.bf16.msra.mxu0 %v112
    %137 = vmatprep.subr.bf16.mxu0 0
    %138 = vmatpush1.bf16.msra.mxu0 0
    %139 = vmatprep.subr.bf16.mxu0 0
    %140 = vmatpush1.bf16.msra.mxu0 0
    %141 = vmatprep.subr.bf16.mxu0 0
    %142 = vmatpush1.bf16.msra.mxu0 0
    %143 = vmatprep.subr.bf16.mxu0 0
    %144 = vmatpush1.bf16.msra.mxu0 0
    %145 = vmatprep.subr.bf16.mxu0 0
    %146 = vmatpush1.bf16.msra.mxu0 0
    %147 = vmatprep.subr.bf16.mxu0 0
    %148 = vmatpush1.bf16.msra.mxu0 0
    %149 = vmatprep.subr.bf16.mxu0 0
    %150 = vmatpush1.bf16.msra.mxu0 0
    %151 = vmatprep.subr.bf16.mxu0 0
    %152 = vmatpush1.bf16.msra.mxu0 0
    %153 = vmatprep.mubr.bf16.mxu0 0
    %154 = vmatmul.mubr.bf16.gmra.mrb[0].mxu0 %v49
    %v155 = vpop.f32.mrb[0].mxu0
    %v156 = vadd.f32 %v71, %v155
    %v157 = vpop.f32.mrb[0].mxu0
    %v158 = vpop.f32.mrb[0].mxu0
    %v159 = vpop.f32.mrb[0].mxu0
    %160 = vdwg.mxu0
    %v161 = vmax.f32 %v156, 0.0
    %v162 = vpack.c.bf16 %v161, %v161
    %v163 = vld [vmem:[#allocation4] sm:$0xf]
    %v164 = vld [vmem:[#allocation4 + $0x4] sm:$0xf]
    %v165 = vld [vmem:[#allocation4 + $0x8] sm:$0xf]
    %v166 = vld [vmem:[#allocation4 + $0xc] sm:$0xf]
    %v167 = vld [vmem:[#allocation4 + $0x10] sm:$0xf]
    %v168 = vld [vmem:[#allocation4 + $0x14] sm:$0xf]
    %v169 = vld [vmem:[#allocation4 + $0x18] sm:$0xf]
    %v170 = vld [vmem:[#allocation4 + $0x1c] sm:$0xf]
    %v171 = vld [vmem:[#allocation4 + $0x20] sm:$0xf]
    %v172 = vld [vmem:[#allocation4 + $0x24] sm:$0xf]
    %v173 = vld [vmem:[#allocation4 + $0x28] sm:$0xf]
    %v174 = vld [vmem:[#allocation4 + $0x2c] sm:$0xf]
    %v175 = vld [vmem:[#allocation4 + $0x30] sm:$0xf]
    %v176 = vld [vmem:[#allocation4 + $0x34] sm:$0xf]
    %v177 = vld [vmem:[#allocation4 + $0x38] sm:$0xf]
    %v178 = vld [vmem:[#allocation4 + $0x3c] sm:$0xf]
    %v179 = vld [vmem:[%s4] sm:$0x1]
    %v181 = vlaneseq
    %v182 = vshrl.u32 %v181, 7
    %v183 = vsub.s32 0, %v182
    %v184 = vrot.slane %v179, %v183
    %v202 = vunpack.c.l.b16 %v163
    %v203 = vunpack.c.l.b16 %v164
    %v204 = vunpack.c.l.b16 %v165
    %v205 = vunpack.c.l.b16 %v166
    %v206 = vunpack.c.l.b16 %v167
    %v207 = vunpack.c.l.b16 %v168
    %v208 = vunpack.c.l.b16 %v169
    %v209 = vunpack.c.l.b16 %v170
    %v210 = vunpack.c.l.b16 %v171
    %v211 = vunpack.c.l.b16 %v172
    %v212 = vunpack.c.l.b16 %v173
    %v213 = vunpack.c.l.b16 %v174
    %v214 = vunpack.c.l.b16 %v175
    %v215 = vunpack.c.l.b16 %v176
    %v216 = vunpack.c.l.b16 %v177
    %v217 = vunpack.c.l.b16 %v178
    %v218 = vpack.c.b16 %v203, %v202
    %v219 = vpack.c.b16 %v205, %v204
    %v220 = vpack.c.b16 %v207, %v206
    %v221 = vpack.c.b16 %v209, %v208
    %v222 = vpack.c.b16 %v211, %v210
    %v223 = vpack.c.b16 %v213, %v212
    %v224 = vpack.c.b16 %v215, %v214
    %v225 = vpack.c.b16 %v217, %v216
    %234 = vmatprep.subr.bf16.mxu0 0
    %235 = vmatpush1.bf16.msra.mxu0 %v218
    %236 = vmatprep.subr.bf16.mxu0 0
    %237 = vmatpush1.bf16.msra.mxu0 %v219
    %238 = vmatprep.subr.bf16.mxu0 0
    %239 = vmatpush1.bf16.msra.mxu0 %v220
    %240 = vmatprep.subr.bf16.mxu0 0
    %241 = vmatpush1.bf16.msra.mxu0 %v221
    %242 = vmatprep.subr.bf16.mxu0 0
    %243 = vmatpush1.bf16.msra.mxu0 %v222
    %244 = vmatprep.subr.bf16.mxu0 0
    %245 = vmatpush1.bf16.msra.mxu0 %v223
    %246 = vmatprep.subr.bf16.mxu0 0
    %247 = vmatpush1.bf16.msra.mxu0 %v224
    %248 = vmatprep.subr.bf16.mxu0 0
    %249 = vmatpush1.bf16.msra.mxu0 %v225
    %250 = vmatprep.subr.bf16.mxu0 0
    %251 = vmatpush1.bf16.msra.mxu0 0
    %252 = vmatprep.subr.bf16.mxu0 0
    %253 = vmatpush1.bf16.msra.mxu0 0
    %254 = vmatprep.subr.bf16.mxu0 0
    %255 = vmatpush1.bf16.msra.mxu0 0
    %256 = vmatprep.subr.bf16.mxu0 0
    %257 = vmatpush1.bf16.msra.mxu0 0
    %258 = vmatprep.subr.bf16.mxu0 0
    %259 = vmatpush1.bf16.msra.mxu0 0
    %260 = vmatprep.subr.bf16.mxu0 0
    %261 = vmatpush1.bf16.msra.mxu0 0
    %262 = vmatprep.subr.bf16.mxu0 0
    %263 = vmatpush1.bf16.msra.mxu0 0
    %264 = vmatprep.subr.bf16.mxu0 0
    %265 = vmatpush1.bf16.msra.mxu0 0
    %266 = vmatprep.mubr.bf16.mxu0 0
    %267 = vmatmul.mubr.bf16.gmra.mrb[0].mxu0 %v162
    %v268 = vpop.f32.mrb[0].mxu0
    %v269 = vadd.f32 %v184, %v268
    %v270 = vpop.f32.mrb[0].mxu0
    %v271 = vpop.f32.mrb[0].mxu0
    %v272 = vpop.f32.mrb[0].mxu0
    %273 = vdwg.mxu0
    %274 = vst [vmem:[%s5] sm:$0xff] %v269
    // Predicated region
    $region30: #{linear_net_forward.1} parent=1 // pred_check
      _
    $region31: #{linear_net_forward.1} parent=1 // pred_check_branch
      %276 = sbr.rel (0) target = $region33
    $region32: #{linear_net_forward.1} parent=1 // pred_region
      _
    $region33: #{linear_net_forward.1} parent=1 // pred_fallthru
      _
    // Predicated region
    $region34: #{linear_net_forward.1} parent=1 // pred_check
      _
    $region35: #{linear_net_forward.1} parent=1 // pred_check_branch
      %278 = sbr.rel (0) target = $region37
    $region36: #{linear_net_forward.1} parent=1 // pred_region
      _
    $region37: #{linear_net_forward.1} parent=1 // pred_fallthru
      _
    %279 = vsyncpa [#allocation3], 1
    %280 = vsyncpa [#allocation5], 1

</llo_original>
